<compile_context>
chip_gen: v7x
topology: tpu7x:2x2x1
jax: 0.10.0
libtpu: 0.0.40
codegen_flags: <defaults>
</compile_context>

<pallas_src>
import functools

import jax
import jax.numpy as jnp
from jax import lax
from jax.experimental import pallas as pl
from jax.experimental.pallas import tpu as pltpu


def _round_up(x, m):
    return ((x + m - 1) // m) * m


# --------------------------------- kernel body ---------------------------------------
def _tcn_block_kernel(K, dilation, has_skip, fuse_taps, carry,
                      x_ref, w1_ref, b1_ref, w2_ref, b2_ref, *rest):
    """relu(conv2(relu(conv1(x))) + skip(x)) for one (batch, time-tile) grid cell.
    Channels live on sublanes, time on lanes.  The causal halo (previous tile's x and
    relu(conv1(x))) is carried across the inner grid axis in VMEM scratch."""
    if has_skip:
        wskip_ref, bskip_ref, o_ref, xh_ref, hh_ref = rest
    else:
        o_ref, xh_ref, hh_ref = rest

    TT = x_ref.shape[2]            # time-tile width (lane axis), multiple of 128
    cdtype = x_ref.dtype           # MXU compute dtype (bf16 or f32)
    t = pl.program_id(1)

    if carry:
        # Causal zero history at the first time tile of every batch.
        @pl.when(t == 0)
        def _():
            xh_ref[...] = jnp.zeros_like(xh_ref)
            hh_ref[...] = jnp.zeros_like(hh_ref)
        x_prev = xh_ref[...]                       # (Cin,  TT) previous tile of x
        h_prev = hh_ref[...]                       # (Cout, TT) previous tile of relu(conv1)
    else:
        x_prev = None                              # single tile: history is exactly zero
        h_prev = None

    x_cur = x_ref[0]                               # (Cin, TT)

    # tap j looks back by s_j = (K-1-j)*dilation columns
    shifts = [(K - 1 - j) * dilation for j in range(K)]
    lane = lax.broadcasted_iota(jnp.int32, (1, TT), 1)
    keep = {s: lane >= s for s in set(shifts) if s > 0}      # hoisted, reused by both convs

    def window(cur, prev, s):
        """win[:, i] = (prev ++ cur)[:, TT + i - s] built from XLU rolls + a lane mask
        (no unaligned lane slices, no activation concats along lanes)."""
        if s == 0:
            return cur
        sh = s % TT                                # s <= TT is guaranteed by the wrapper
        rc = pltpu.roll(cur, shift=sh, axis=1) if sh else cur
        if prev is None:                           # causal zero history
            return jnp.where(keep[s], rc, jnp.zeros_like(rc))
        rp = pltpu.roll(prev, shift=sh, axis=1) if sh else prev
        return jnp.where(keep[s], rc, rp)

    def conv(w_ref, cur, prev):
        if fuse_taps:
            # im2col over taps along the sublane axis -> one MXU dot (depth K*C)
            wins = [window(cur, prev, s) for s in shifts]
            cat = wins[0] if K == 1 else jnp.concatenate(wins, axis=0)
            return jnp.dot(w_ref[...], cat, preferred_element_type=jnp.float32)
        # per-tap dots accumulated in f32 (wide channels: contraction already fills MXU)
        acc = jnp.dot(w_ref[0], window(cur, prev, shifts[0]),
                      preferred_element_type=jnp.float32)
        for j in range(1, K):
            acc = acc + jnp.dot(w_ref[j], window(cur, prev, shifts[j]),
                                preferred_element_type=jnp.float32)
        return acc

    # ---- conv1 -> ReLU -------------------------------------------------------------
    h1 = jnp.maximum(conv(w1_ref, x_cur, x_prev) + b1_ref[...], 0.0)   # (Cout, TT) f32
    h1c = h1.astype(cdtype)

    # ---- conv2 -> ReLU (halo = carried previous tile's relu(conv1)) -----------------
    h2 = jnp.maximum(conv(w2_ref, h1c, h_prev) + b2_ref[...], 0.0)     # (Cout, TT) f32

    # ---- carry the halo for the next time tile of this batch ------------------------
    if carry:
        xh_ref[...] = x_cur
        hh_ref[...] = h1c

    # ---- skip path (1x1 conv if Cin != Cout) + final ReLU, in f32 -------------------
    if has_skip:
        res = jnp.dot(wskip_ref[...], x_cur,
                      preferred_element_type=jnp.float32) + bskip_ref[...]
    else:
        res = x_cur.astype(jnp.float32)
    o_ref[0] = jnp.maximum(h2 + res, 0.0).astype(o_ref.dtype)


# --------------------------------- tiling helpers ------------------------------------
def _vmem_capacity_bytes():
    try:
        info = pltpu.get_tpu_info()
        cap = getattr(info, "vmem_capacity_bytes", None)
        if cap:
            return int(cap)
    except Exception:
        pass
    return 64 * 1024 * 1024          # conservative default (v7x per-core VMEM)


def _step_vmem_bytes(tt, Cin, Cout, K, act_bytes, out_bytes, has_skip):
    """Flat-sum estimate of the per-grid-step VMEM working set (conservative)."""
    x_tiles = 2 * Cin * tt * act_bytes                 # double-buffered x tile
    o_tiles = 2 * Cout * tt * out_bytes                # double-buffered output tile
    carry = (Cin + Cout) * tt * act_bytes              # halo scratch
    interm = K * (Cin + Cout) * tt * act_bytes + 3 * Cout * tt * 4   # windows + f32 temps
    w_elems = K * Cin * Cout + K * Cout * Cout + (Cin * Cout if has_skip else 0)
    weights = 2 * (w_elems * act_bytes + 2 * Cout * 4)
    return x_tiles + o_tiles + carry + interm + weights


def _choose_time_tile(T, P, Cin, Cout, K, act_bytes, out_bytes, has_skip):
    """Largest 128-multiple time tile whose working set fits ~35% of physical VMEM
    (generation-aware), capped at 2048 and the padded sequence length, and never smaller
    than the causal halo P (required for the single-tile-lookback carry)."""
    budget = int(0.35 * _vmem_capacity_bytes())
    t_cap = min(2048, _round_up(max(T, 1), 128))
    best, tt = 128, 128
    while tt <= t_cap:
        if _step_vmem_bytes(tt, Cin, Cout, K, act_bytes, out_bytes, has_skip) <= budget:
            best = tt
        tt += 128
    return max(best, _round_up(max(P, 1), 128))


# --------------------------------- wrapper -------------------------------------------
def tcn_residual_block(x_ncl, params, kernel_size, dilation, *,
                       time_tile=None, use_bf16=True, out_dtype=jnp.float32,
                       fuse_taps=None):
    """x_ncl: (B, Cin, T) float32 (PyTorch Conv1d layout).  Returns (B, Cout, T)."""
    w1, b1, w2, b2, wskip, bskip = params
    B, Cin, T = x_ncl.shape
    Cout = w1.shape[0]
    K = kernel_size
    P = (K - 1) * dilation
    has_skip = wskip is not None

    cdtype = jnp.bfloat16 if use_bf16 else jnp.float32
    act_bytes = jnp.dtype(cdtype).itemsize
    out_bytes = jnp.dtype(out_dtype).itemsize

    if fuse_taps is None:
        # Fold taps into one contraction only while the per-tap contraction is small;
        # wide channels (>=128) already fill the MXU, so use per-tap accumulation.
        fuse_taps = max(Cin, Cout) < 128

    if time_tile is None:
        TT = _choose_time_tile(T, P, Cin, Cout, K, act_bytes, out_bytes, has_skip)
    else:
        TT = int(time_tile)
        assert TT % 128 == 0, "time_tile must be a multiple of 128 lanes"
        assert TT >= P, "time_tile must be >= (kernel_size-1)*dilation"

    T_pad = _round_up(T, TT)
    num_t = T_pad // TT
    carry = num_t > 1

    x = x_ncl.astype(cdtype)                       # channels-first / time-last already
    if T_pad != T:
        # Trailing zero pad: causal conv => the padded tail never influences cols < T.
        x = jnp.pad(x, ((0, 0), (0, 0), (0, T_pad - T)))

    # Weight layouts (host-side, tiny).
    const2 = lambda b, t: (0, 0)
    if fuse_taps:
        w1_k = jnp.transpose(w1, (0, 2, 1)).reshape(Cout, K * Cin).astype(cdtype)
        w2_k = jnp.transpose(w2, (0, 2, 1)).reshape(Cout, K * Cout).astype(cdtype)
        w1_spec = pl.BlockSpec((Cout, K * Cin), const2)
        w2_spec = pl.BlockSpec((Cout, K * Cout), const2)
    else:
        w1_k = jnp.transpose(w1, (2, 0, 1)).astype(cdtype)     # (K, Cout, Cin)
        w2_k = jnp.transpose(w2, (2, 0, 1)).astype(cdtype)     # (K, Cout, Cout)
        const3 = lambda b, t: (0, 0, 0)
        w1_spec = pl.BlockSpec((K, Cout, Cin), const3)
        w2_spec = pl.BlockSpec((K, Cout, Cout), const3)
    b1_c = b1.reshape(Cout, 1).astype(jnp.float32)
    b2_c = b2.reshape(Cout, 1).astype(jnp.float32)

    inputs = [x, w1_k, b1_c, w2_k, b2_c]
    in_specs = [
        pl.BlockSpec((1, Cin, TT), lambda b, t: (b, 0, t)),    # single x stream
        w1_spec,                                               # weights: constant along t
        pl.BlockSpec((Cout, 1), const2),
        w2_spec,
        pl.BlockSpec((Cout, 1), const2),
    ]
    if has_skip:
        inputs += [wskip[:, :, 0].astype(cdtype),
                   bskip.reshape(Cout, 1).astype(jnp.float32)]
        in_specs += [pl.BlockSpec((Cout, Cin), const2),
                     pl.BlockSpec((Cout, 1), const2)]

    flops = 2 * B * T_pad * (K * Cin * Cout + K * Cout * Cout
                             + (Cin * Cout if has_skip else 0))
    bytes_accessed = (x.size * act_bytes + B * Cout * T_pad * out_bytes
                      + (w1_k.size + w2_k.size) * act_bytes)

    cap = _vmem_capacity_bytes()
    step_bytes = _step_vmem_bytes(TT, Cin, Cout, K, act_bytes, out_bytes, has_skip)
    vmem_limit = int(min(0.75 * cap, max(32 * 1024 * 1024, 2 * step_bytes)))

    kernel = functools.partial(_tcn_block_kernel, K, dilation, has_skip, fuse_taps, carry)
    out = pl.pallas_call(
        kernel,
        out_shape=jax.ShapeDtypeStruct((B, Cout, T_pad), out_dtype),
        grid=(B, num_t),
        in_specs=in_specs,
        out_specs=pl.BlockSpec((1, Cout, TT), lambda b, t: (b, 0, t)),
        scratch_shapes=[pltpu.VMEM((Cin, TT), cdtype),    # carried x halo
                        pltpu.VMEM((Cout, TT), cdtype)],  # carried relu(conv1(x)) halo
        compiler_params=pltpu.CompilerParams(
            # B parallel (megacore), time axis sequential (carries the halo scratch).
            dimension_semantics=("parallel", "arbitrary"),
            vmem_limit_bytes=vmem_limit),
        cost_estimate=pl.CostEstimate(flops=flops, transcendentals=0,
                                      bytes_accessed=bytes_accessed),
    )(*inputs)
    if T_pad != T:
        out = out[:, :, :T]
    return out


# ---------------- plain-JAX reference (mirrors the PyTorch forward) ------------------
def _ref_causal_conv1d(x, w, b, dilation):
    K = w.shape[-1]
    P = (K - 1) * dilation
    y = lax.conv_general_dilated(
        x, w, window_strides=(1,), padding=[(P, P)], rhs_dilation=(dilation,),
        dimension_numbers=("NCH", "OIH", "NCH"))
    y = y + b[None, :, None]
    return y[:, :, :-P]


def _ref_tcn_block(x, params, kernel_size, dilation):
    w1, b1, w2, b2, wskip, bskip = params
    residual = x
    h = jax.nn.relu(_ref_causal_conv1d(x, w1, b1, dilation))
    h = jax.nn.relu(_ref_causal_conv1d(h, w2, b2, dilation))
    if wskip is not None:
        residual = lax.conv_general_dilated(
            residual, wskip, window_strides=(1,), padding=[(0, 0)],
            dimension_numbers=("NCH", "OIH", "NCH")) + bskip[None, :, None]
    return jax.nn.relu(h + residual)


def _make_params(key, c_in, c_out, k):
    ks = jax.random.split(key, 6)
    scale = 0.2
    w1 = scale * jax.random.normal(ks[0], (c_out, c_in, k), jnp.float32)
    b1 = scale * jax.random.normal(ks[1], (c_out,), jnp.float32)
    w2 = scale * jax.random.normal(ks[2], (c_out, c_out, k), jnp.float32)
    b2 = scale * jax.random.normal(ks[3], (c_out,), jnp.float32)
    if c_in != c_out:
        wskip = scale * jax.random.normal(ks[4], (c_out, c_in, 1), jnp.float32)
        bskip = scale * jax.random.normal(ks[5], (c_out,), jnp.float32)
    else:
        wskip, bskip = None, None
    return (w1, b1, w2, b2, wskip, bskip)


if __name__ == "__main__":
    key = jax.random.PRNGKey(0)

    def run_case(case_key, B, c_in, c_out, T, K, DIL, **kw):
        kx, kp = jax.random.split(case_key)
        x = jax.random.normal(kx, (B, c_in, T), jnp.float32)
        params = _make_params(kp, c_in, c_out, K)
        ref = _ref_tcn_block(x, params, K, DIL)

        out_f32 = jax.block_until_ready(
            tcn_residual_block(x, params, K, DIL, use_bf16=False, **kw))
        assert out_f32.shape == (B, c_out, T)
        assert jnp.allclose(out_f32, ref, atol=1e-4, rtol=1e-4), "f32 path mismatch"

        out_bf16 = jax.block_until_ready(
            tcn_residual_block(x, params, K, DIL, use_bf16=True, **kw))
        assert jnp.allclose(out_bf16, ref, atol=1e-1, rtol=1e-1), "bf16 path mismatch"

    k1, k2, k3, k4 = jax.random.split(key, 4)
    # 1x1-conv skip, 4 time tiles per batch -> exercises the carried halo and the
    # @pl.when(t==0) reset across the batch boundary.
    run_case(k1, B=2, c_in=4, c_out=8, T=512, K=3, DIL=2, time_tile=128)
    # identity skip, auto tile selection (single tile), larger dilation
    run_case(k2, B=2, c_in=8, c_out=8, T=256, K=3, DIL=4)
    # non-128-multiple T -> wrapper-side zero padding of the time axis
    run_case(k3, B=1, c_in=4, c_out=4, T=100, K=3, DIL=8)
    # per-tap accumulation path (no im2col concat), multiple tiles
    run_case(k4, B=1, c_in=16, c_out=16, T=256, K=3, DIL=2,
             time_tile=128, fuse_taps=False)

    print("KERNEL_OK")
</pallas_src>

<mosaic_0001>
module attributes {stable_mosaic.version = 11 : i64} {
  func.func @_tcn_block_kernel(%arg0: i32, %arg1: i32, %arg2: memref<1x4x128xf32, #tpu.memory_space<vmem>>, %arg3: memref<8x12xf32, #tpu.memory_space<vmem>>, %arg4: memref<8x1xf32, #tpu.memory_space<vmem>>, %arg5: memref<8x24xf32, #tpu.memory_space<vmem>>, %arg6: memref<8x1xf32, #tpu.memory_space<vmem>>, %arg7: memref<8x4xf32, #tpu.memory_space<vmem>>, %arg8: memref<8x1xf32, #tpu.memory_space<vmem>>, %arg9: memref<1x8x128xf32, #tpu.memory_space<vmem>>, %arg10: memref<4x128xf32, #tpu.memory_space<vmem>>, %arg11: memref<8x128xf32, #tpu.memory_space<vmem>>) attributes {dimension_semantics = [#tpu.dimension_semantics<parallel>, #tpu.dimension_semantics<arbitrary>], iteration_bounds = array<i64: 2, 4>, scalar_prefetch = 0 : i64, scratch_operands = 2 : i64, tpu.core_type = #tpu.core_type<tc>, window_params = [{transform_indices = @transform_0, window_bounds = array<i64: 1, 4, 128>}, {pipeline_mode = #tpu.pipeline_mode<synchronous>, transform_indices = @transform_1, window_bounds = array<i64: 8, 12>}, {pipeline_mode = #tpu.pipeline_mode<synchronous>, transform_indices = @transform_2, window_bounds = array<i64: 8, 1>}, {pipeline_mode = #tpu.pipeline_mode<synchronous>, transform_indices = @transform_3, window_bounds = array<i64: 8, 24>}, {pipeline_mode = #tpu.pipeline_mode<synchronous>, transform_indices = @transform_4, window_bounds = array<i64: 8, 1>}, {pipeline_mode = #tpu.pipeline_mode<synchronous>, transform_indices = @transform_5, window_bounds = array<i64: 8, 4>}, {pipeline_mode = #tpu.pipeline_mode<synchronous>, transform_indices = @transform_6, window_bounds = array<i64: 8, 1>}, {transform_indices = @transform_7, window_bounds = array<i64: 1, 8, 128>}]} {
    %c0_i32 = arith.constant 0 : i32
    %0 = arith.cmpi eq, %arg1, %c0_i32 : i32
    %1 = arith.extui %0 : i1 to i32
    %c0_i32_0 = arith.constant 0 : i32
    %2 = arith.cmpi ne, %1, %c0_i32_0 : i32
    scf.if %2 {
      %cst_39 = arith.constant 0.000000e+00 : f32
      %61 = vector.broadcast %cst_39 : f32 to vector<4x128xf32>
      %c0_40 = arith.constant 0 : index
      %c0_41 = arith.constant 0 : index
      %62 = vector.load %arg10[%c0_40, %c0_41] : memref<4x128xf32, #tpu.memory_space<vmem>>, vector<4x128xf32>
      tpu.vector_store %arg10[%c0_40, %c0_41], %61 {strides = array<i32>} : memref<4x128xf32, #tpu.memory_space<vmem>>, vector<4x128xf32>,
      %cst_42 = arith.constant 0.000000e+00 : f32
      %63 = vector.broadcast %cst_42 : f32 to vector<8x128xf32>
      %c0_43 = arith.constant 0 : index
      %c0_44 = arith.constant 0 : index
      %64 = vector.load %arg11[%c0_43, %c0_44] : memref<8x128xf32, #tpu.memory_space<vmem>>, vector<8x128xf32>
      tpu.vector_store %arg11[%c0_43, %c0_44], %63 {strides = array<i32>} : memref<8x128xf32, #tpu.memory_space<vmem>>, vector<8x128xf32>,
    } else {
    }
    %c0 = arith.constant 0 : index
    %c0_1 = arith.constant 0 : index
    %3 = vector.load %arg10[%c0, %c0_1] : memref<4x128xf32, #tpu.memory_space<vmem>>, vector<4x128xf32>
    %c0_2 = arith.constant 0 : index
    %c0_3 = arith.constant 0 : index
    %4 = vector.load %arg11[%c0_2, %c0_3] : memref<8x128xf32, #tpu.memory_space<vmem>>, vector<8x128xf32>
    %c0_4 = arith.constant 0 : index
    %c0_5 = arith.constant 0 : index
    %c0_6 = arith.constant 0 : index
    %5 = vector.load %arg2[%c0_4, %c0_5, %c0_6] : memref<1x4x128xf32, #tpu.memory_space<vmem>>, vector<1x4x128xf32>
    %6 = vector.shape_cast %5 : vector<1x4x128xf32> to vector<4x128xf32>
    %7 = tpu.iota {dimensions = array<i32: 1>} : vector<1x128xi32>
    %c2_i32 = arith.constant 2 : i32
    %8 = vector.broadcast %c2_i32 : i32 to vector<1x128xi32>
    %9 = arith.cmpi sge, %7, %8 : vector<1x128xi32>
    %c4_i32 = arith.constant 4 : i32
    %10 = vector.broadcast %c4_i32 : i32 to vector<1x128xi32>
    %11 = arith.cmpi sge, %7, %10 : vector<1x128xi32>
    %c4_i32_7 = arith.constant 4 : i32
    %12 = tpu.dynamic_rotate %6 by %c4_i32_7 dim 1 : vector<4x128xf32>, i32 -> vector<4x128xf32>
    %c4_i32_8 = arith.constant 4 : i32
    %13 = tpu.dynamic_rotate %3 by %c4_i32_8 dim 1 : vector<4x128xf32>, i32 -> vector<4x128xf32>
    %14 = vector.shape_cast %11 : vector<1x128xi1> to vector<1x128xi1>
    %15 = vector.broadcast %14 : vector<1x128xi1> to vector<4x128xi1>
    %16 = arith.select %15, %12, %13 : vector<4x128xi1>, vector<4x128xf32>
    %c2_i32_9 = arith.constant 2 : i32
    %17 = tpu.dynamic_rotate %6 by %c2_i32_9 dim 1 : vector<4x128xf32>, i32 -> vector<4x128xf32>
    %c2_i32_10 = arith.constant 2 : i32
    %18 = tpu.dynamic_rotate %3 by %c2_i32_10 dim 1 : vector<4x128xf32>, i32 -> vector<4x128xf32>
    %19 = vector.shape_cast %9 : vector<1x128xi1> to vector<1x128xi1>
    %20 = vector.broadcast %19 : vector<1x128xi1> to vector<4x128xi1>
    %21 = arith.select %20, %17, %18 : vector<4x128xi1>, vector<4x128xf32>
    %22 = tpu.concatenate %16, %21, %6 in 0 : vector<4x128xf32>, vector<4x128xf32>, vector<4x128xf32> -> vector<12x128xf32>
    %c0_11 = arith.constant 0 : index
    %c0_12 = arith.constant 0 : index
    %23 = vector.load %arg3[%c0_11, %c0_12] : memref<8x12xf32, #tpu.memory_space<vmem>>, vector<8x12xf32>
    %cst = arith.constant dense<0.000000e+00> : vector<8x128xf32>
    %24 = tpu.matmul %23, %22, %cst {dimension_numbers = #tpu.dot_dimension_numbers<[1], [0], [0], [1], [0, 0, 1, 1], [], []>} : vector<8x12xf32>, vector<12x128xf32>, vector<8x128xf32> -> vector<8x128xf32>
    %c0_13 = arith.constant 0 : index
    %c0_14 = arith.constant 0 : index
    %25 = vector.load %arg4[%c0_13, %c0_14] : memref<8x1xf32, #tpu.memory_space<vmem>>, vector<8x1xf32>
    %26 = vector.broadcast %25 : vector<8x1xf32> to vector<8x128xf32>
    %27 = arith.addf %24, %26 : vector<8x128xf32>
    %cst_15 = arith.constant 0.000000e+00 : f32
    %28 = vector.broadcast %cst_15 : f32 to vector<8x128xf32>
    %29 = arith.maximumf %27, %28 : vector<8x128xf32>
    %c4_i32_16 = arith.constant 4 : i32
    %30 = tpu.dynamic_rotate %29 by %c4_i32_16 dim 1 : vector<8x128xf32>, i32 -> vector<8x128xf32>
    %c4_i32_17 = arith.constant 4 : i32
    %31 = tpu.dynamic_rotate %4 by %c4_i32_17 dim 1 : vector<8x128xf32>, i32 -> vector<8x128xf32>
    %32 = vector.shape_cast %11 : vector<1x128xi1> to vector<1x128xi1>
    %33 = vector.broadcast %32 : vector<1x128xi1> to vector<8x128xi1>
    %34 = arith.select %33, %30, %31 : vector<8x128xi1>, vector<8x128xf32>
    %c2_i32_18 = arith.constant 2 : i32
    %35 = tpu.dynamic_rotate %29 by %c2_i32_18 dim 1 : vector<8x128xf32>, i32 -> vector<8x128xf32>
    %c2_i32_19 = arith.constant 2 : i32
    %36 = tpu.dynamic_rotate %4 by %c2_i32_19 dim 1 : vector<8x128xf32>, i32 -> vector<8x128xf32>
    %37 = vector.shape_cast %9 : vector<1x128xi1> to vector<1x128xi1>
    %38 = vector.broadcast %37 : vector<1x128xi1> to vector<8x128xi1>
    %39 = arith.select %38, %35, %36 : vector<8x128xi1>, vector<8x128xf32>
    %40 = tpu.concatenate %34, %39, %29 in 0 : vector<8x128xf32>, vector<8x128xf32>, vector<8x128xf32> -> vector<24x128xf32>
    %c0_20 = arith.constant 0 : index
    %c0_21 = arith.constant 0 : index
    %41 = vector.load %arg5[%c0_20, %c0_21] : memref<8x24xf32, #tpu.memory_space<vmem>>, vector<8x24xf32>
    %cst_22 = arith.constant dense<0.000000e+00> : vector<8x128xf32>
    %42 = tpu.matmul %41, %40, %cst_22 {dimension_numbers = #tpu.dot_dimension_numbers<[1], [0], [0], [1], [0, 0, 1, 1], [], []>} : vector<8x24xf32>, vector<24x128xf32>, vector<8x128xf32> -> vector<8x128xf32>
    %c0_23 = arith.constant 0 : index
    %c0_24 = arith.constant 0 : index
    %43 = vector.load %arg6[%c0_23, %c0_24] : memref<8x1xf32, #tpu.memory_space<vmem>>, vector<8x1xf32>
    %44 = vector.broadcast %43 : vector<8x1xf32> to vector<8x128xf32>
    %45 = arith.addf %42, %44 : vector<8x128xf32>
    %cst_25 = arith.constant 0.000000e+00 : f32
    %46 = vector.broadcast %cst_25 : f32 to vector<8x128xf32>
    %47 = arith.maximumf %45, %46 : vector<8x128xf32>
    %c0_26 = arith.constant 0 : index
    %c0_27 = arith.constant 0 : index
    %48 = vector.load %arg10[%c0_26, %c0_27] : memref<4x128xf32, #tpu.memory_space<vmem>>, vector<4x128xf32>
    tpu.vector_store %arg10[%c0_26, %c0_27], %6 {strides = array<i32>} : memref<4x128xf32, #tpu.memory_space<vmem>>, vector<4x128xf32>,
    %c0_28 = arith.constant 0 : index
    %c0_29 = arith.constant 0 : index
    %49 = vector.load %arg11[%c0_28, %c0_29] : memref<8x128xf32, #tpu.memory_space<vmem>>, vector<8x128xf32>
    tpu.vector_store %arg11[%c0_28, %c0_29], %29 {strides = array<i32>} : memref<8x128xf32, #tpu.memory_space<vmem>>, vector<8x128xf32>,
    %c0_30 = arith.constant 0 : index
    %c0_31 = arith.constant 0 : index
    %50 = vector.load %arg7[%c0_30, %c0_31] : memref<8x4xf32, #tpu.memory_space<vmem>>, vector<8x4xf32>
    %cst_32 = arith.constant dense<0.000000e+00> : vector<8x128xf32>
    %51 = tpu.matmul %50, %6, %cst_32 {dimension_numbers = #tpu.dot_dimension_numbers<[1], [0], [0], [1], [0, 0, 1, 1], [], []>} : vector<8x4xf32>, vector<4x128xf32>, vector<8x128xf32> -> vector<8x128xf32>
    %c0_33 = arith.constant 0 : index
    %c0_34 = arith.constant 0 : index
    %52 = vector.load %arg8[%c0_33, %c0_34] : memref<8x1xf32, #tpu.memory_space<vmem>>, vector<8x1xf32>
    %53 = vector.broadcast %52 : vector<8x1xf32> to vector<8x128xf32>
    %54 = arith.addf %51, %53 : vector<8x128xf32>
    %55 = arith.addf %47, %54 : vector<8x128xf32>
    %cst_35 = arith.constant 0.000000e+00 : f32
    %56 = vector.broadcast %cst_35 : f32 to vector<8x128xf32>
    %57 = arith.maximumf %55, %56 : vector<8x128xf32>
    %c0_36 = arith.constant 0 : index
    %c0_37 = arith.constant 0 : index
    %c0_38 = arith.constant 0 : index
    %58 = vector.load %arg9[%c0_36, %c0_37, %c0_38] : memref<1x8x128xf32, #tpu.memory_space<vmem>>, vector<1x8x128xf32>
    %59 = vector.shape_cast %58 : vector<1x8x128xf32> to vector<8x128xf32>
    %60 = vector.shape_cast %57 : vector<8x128xf32> to vector<1x8x128xf32>
    tpu.vector_store %arg9[%c0_36, %c0_37, %c0_38], %60 {strides = array<i32>} : memref<1x8x128xf32, #tpu.memory_space<vmem>>, vector<1x8x128xf32>,
    return
  }
  func.func @transform_0(%arg0: i32, %arg1: i32) -> (i32, i32, i32) {
    %c0_i32 = arith.constant 0 : i32
    %c0_i32_0 = arith.constant 0 : i32
    return %arg0, %c0_i32, %arg1 : i32, i32, i32
  }
  func.func @transform_1(%arg0: i32, %arg1: i32) -> (i32, i32) {
    %c0_i32 = arith.constant 0 : i32
    %c0_i32_0 = arith.constant 0 : i32
    %c0_i32_1 = arith.constant 0 : i32
    return %c0_i32, %c0_i32_0 : i32, i32
  }
  func.func @transform_2(%arg0: i32, %arg1: i32) -> (i32, i32) {
    %c0_i32 = arith.constant 0 : i32
    %c0_i32_0 = arith.constant 0 : i32
    %c0_i32_1 = arith.constant 0 : i32
    return %c0_i32, %c0_i32_0 : i32, i32
  }
  func.func @transform_3(%arg0: i32, %arg1: i32) -> (i32, i32) {
    %c0_i32 = arith.constant 0 : i32
    %c0_i32_0 = arith.constant 0 : i32
    %c0_i32_1 = arith.constant 0 : i32
    return %c0_i32, %c0_i32_0 : i32, i32
  }
  func.func @transform_4(%arg0: i32, %arg1: i32) -> (i32, i32) {
    %c0_i32 = arith.constant 0 : i32
    %c0_i32_0 = arith.constant 0 : i32
    %c0_i32_1 = arith.constant 0 : i32
    return %c0_i32, %c0_i32_0 : i32, i32
  }
  func.func @transform_5(%arg0: i32, %arg1: i32) -> (i32, i32) {
    %c0_i32 = arith.constant 0 : i32
    %c0_i32_0 = arith.constant 0 : i32
    %c0_i32_1 = arith.constant 0 : i32
    return %c0_i32, %c0_i32_0 : i32, i32
  }
  func.func @transform_6(%arg0: i32, %arg1: i32) -> (i32, i32) {
    %c0_i32 = arith.constant 0 : i32
    %c0_i32_0 = arith.constant 0 : i32
    %c0_i32_1 = arith.constant 0 : i32
    return %c0_i32, %c0_i32_0 : i32, i32
  }
  func.func @transform_7(%arg0: i32, %arg1: i32) -> (i32, i32, i32) {
    %c0_i32 = arith.constant 0 : i32
    %c0_i32_0 = arith.constant 0 : i32
    return %arg0, %c0_i32, %arg1 : i32, i32, i32
  }
}

</mosaic_0001>

<llo_original>
// kernel: tpu_custom_call.1
$region0: #{tpu_custom_call.1}
  #allocation0 [shape = 'u32[]', space=smem, size = 0x4, offset = 0x4, fixed_abs, tag = 'smem constant byte address 0x4 - core index']
  #allocation1 [shape = 'u32[144,128]{1,0:T(1,128)}', space=vmem, size = 0x12000, scoped, tag = 'internal scratch']
  #allocation2 [shape = 'f32[4,128]{1,0:T(4,128)}', space=vmem, size = 0x800, scoped, tag = 'scratch operand']
  #allocation3 [shape = 'f32[8,128]{1,0:T(8,128)}', space=vmem, size = 0x1000, scoped, tag = 'scratch operand']
  %s0 = inlined_call_operand.vmem [shape: f32[2,4,512], index: 0, kind: input, shape index: {}]
  %s1 = inlined_call_operand.vmem [shape: f32[8,12], index: 1, kind: input, shape index: {}]
  %s2 = inlined_call_operand.vmem [shape: f32[8,1], index: 2, kind: input, shape index: {}]
  %s3 = inlined_call_operand.vmem [shape: f32[8,24], index: 3, kind: input, shape index: {}]
  %s4 = inlined_call_operand.vmem [shape: f32[8,1], index: 4, kind: input, shape index: {}]
  %s5 = inlined_call_operand.vmem [shape: f32[8,4], index: 5, kind: input, shape index: {}]
  %s6 = inlined_call_operand.vmem [shape: f32[8,1], index: 6, kind: input, shape index: {}]
  %s7 = inlined_call_operand.hbm [shape: f32[2,8,512], index: 7, kind: output, shape index: {}]
  %s8 = sld [smem:[#allocation0]]
  $region65: #{tpu_custom_call.1} parent=0
    _
  %s10 = ssub.s32 1, %s8
  %s11 = scalar_select 0, %s10, %s8
  $region1: #{tpu_custom_call.1} parent=0
    #allocation4 [shape = 'u8[8192]{0}', space=vmem, size = 0x2000, scoped, tag = 'output window, operand 0']
    #allocation5 [shape = 's32[2]{0}', space=sflag, size = 0x8, scoped, tag = 'scoped memory for tpu_custom_call.1']
    %12 = vsyncpa [#allocation5], 0
    %s13 = scalar_lea.sflag [#allocation5], 1
    %14 = vsyncpa %s13, 0
    loop: start=0, step=1, limit=10
    $region2: #{tpu_custom_call.1} parent=1 // loop_pre_header
      _
    $region3: #{tpu_custom_call.1} parent=1 // loop_header
      %s16 = sphi 0, %s20
      %p17 = scmp.ge.s32.totalorder %s16, 10
      %s23 = sphi 0, %s35
      %s24 = sphi 0, %s31
      %s25 = sphi 0, %s23
      %s26 = sphi 0, %s24
      %s27 = sphi 0, %s25
      %s28 = sphi 0, %s26
      %s40 = sphi 0, %s42
      %s43 = sphi 0, %s40
      %s44 = sphi 0, %s43
      %s60 = sphi 0, %s44
      %s64 = sphi 0, %s64
      %s66 = sphi 0, %s64
      %s67 = sphi 0, %s66
      %s81 = sphi 0, %s67
      %s85 = sphi 0, %s85
      %s87 = sphi 0, %s85
      %s88 = sphi 0, %s87
      %s102 = sphi 0, %s88
      %s106 = sphi 0, %s106
      %s108 = sphi 0, %s106
      %s109 = sphi 0, %s108
      %s123 = sphi 0, %s109
      %s127 = sphi 0, %s127
      %s129 = sphi 0, %s127
      %s130 = sphi 0, %s129
      %s144 = sphi 0, %s130
      %s148 = sphi 0, %s148
      %s150 = sphi 0, %s148
      %s151 = sphi 0, %s150
      %s165 = sphi 0, %s151
      %s169 = sphi 0, %s169
      %s171 = sphi 0, %s169
      %s172 = sphi 0, %s171
      %s186 = sphi 0, %s172
      %s194 = sphi 0, %s196
      %s197 = sphi 0, %s194
      %s198 = sphi 0, %s197
      %s214 = sphi 0, %s198
    $region4: #{tpu_custom_call.1} parent=1 // loop_header_branch
      %19 = sbr.rel (%p17) target = $region8
    $region5: #{tpu_custom_call.1} parent=1 // loop_body
      %s21 = ssub.s32 %s16, 1
      %s22 = ssub.s32 %s16, 2
      %s29 = sadd.s32 1, %s24
      %p30 = scmp.ge.s32.totalorder %s29, 4
      %s31 = scalar_select %p30, 0, %s29
      %s32 = sadd.s32 1, %s23
      %s33 = scalar_select %p30, %s32, %s23
      %p34 = scmp.ge.s32.totalorder %s33, 2
      %s35 = scalar_select %p34, 0, %s33
      %s36 = ssub.s32 %s23, %s35
      %s37 = ssub.s32 %s24, %s31
      %s38 = sor.u32 %s36, %s37
      %p39 = scmp.eq.s32.totalorder %s38, 0
      %s41 = sadd.s32 %s40, 1
      %s42 = scalar_select %p39, %s40, %s41
      %p45 = pneg %p39
      %p46 = scmp.eq.s32.totalorder %s16, 7
      %p47 = por %p45, %p46
      %p48 = scmp.ne.s32.totalorder %s40, %s43
      %p49 = scmp.eq.s32.totalorder %s16, 0
      %p50 = por %p48, %p49
      %p51 = scmp.ne.s32.totalorder %s40, %s43
      %p52 = scmp.eq.s32.totalorder %s21, 7
      %p53 = por %p51, %p52
      %p54 = scmp.ne.s32.totalorder %s43, %s44
      %p55 = scmp.eq.s32.totalorder %s21, 0
      %p56 = por %p54, %p55
      %p57 = scmp.ne.s32.totalorder %s43, %s44
      %p58 = scmp.eq.s32.totalorder %s22, 7
      %p59 = por %p57, %p58
      %p61 = scmp.ne.s32.totalorder %s44, %s60
      %p62 = scmp.eq.s32.totalorder %s22, 0
      %p63 = por %p61, %p62
      %s65 = sadd.s32 %s64, 1
      %p68 = scmp.eq.s32.totalorder %s16, 7
      %p69 = scmp.ne.s32.totalorder %s64, %s66
      %p70 = scmp.eq.s32.totalorder %s16, 0
      %p71 = por %p69, %p70
      %p72 = scmp.ne.s32.totalorder %s64, %s66
      %p73 = scmp.eq.s32.totalorder %s21, 7
      %p74 = por %p72, %p73
      %p75 = scmp.ne.s32.totalorder %s66, %s67
      %p76 = scmp.eq.s32.totalorder %s21, 0
      %p77 = por %p75, %p76
      %p78 = scmp.ne.s32.totalorder %s66, %s67
      %p79 = scmp.eq.s32.totalorder %s22, 7
      %p80 = por %p78, %p79
      %p82 = scmp.ne.s32.totalorder %s67, %s81
      %p83 = scmp.eq.s32.totalorder %s22, 0
      %p84 = por %p82, %p83
      %s86 = sadd.s32 %s85, 1
      %p89 = scmp.eq.s32.totalorder %s16, 7
      %p90 = scmp.ne.s32.totalorder %s85, %s87
      %p91 = scmp.eq.s32.totalorder %s16, 0
      %p92 = por %p90, %p91
      %p93 = scmp.ne.s32.totalorder %s85, %s87
      %p94 = scmp.eq.s32.totalorder %s21, 7
      %p95 = por %p93, %p94
      %p96 = scmp.ne.s32.totalorder %s87, %s88
      %p97 = scmp.eq.s32.totalorder %s21, 0
      %p98 = por %p96, %p97
      %p99 = scmp.ne.s32.totalorder %s87, %s88
      %p100 = scmp.eq.s32.totalorder %s22, 7
      %p101 = por %p99, %p100
      %p103 = scmp.ne.s32.totalorder %s88, %s102
      %p104 = scmp.eq.s32.totalorder %s22, 0
      %p105 = por %p103, %p104
      %s107 = sadd.s32 %s106, 1
      %p110 = scmp.eq.s32.totalorder %s16, 7
      %p111 = scmp.ne.s32.totalorder %s106, %s108
      %p112 = scmp.eq.s32.totalorder %s16, 0
      %p113 = por %p111, %p112
      %p114 = scmp.ne.s32.totalorder %s106, %s108
      %p115 = scmp.eq.s32.totalorder %s21, 7
      %p116 = por %p114, %p115
      %p117 = scmp.ne.s32.totalorder %s108, %s109
      %p118 = scmp.eq.s32.totalorder %s21, 0
      %p119 = por %p117, %p118
      %p120 = scmp.ne.s32.totalorder %s108, %s109
      %p121 = scmp.eq.s32.totalorder %s22, 7
      %p122 = por %p120, %p121
      %p124 = scmp.ne.s32.totalorder %s109, %s123
      %p125 = scmp.eq.s32.totalorder %s22, 0
      %p126 = por %p124, %p125
      %s128 = sadd.s32 %s127, 1
      %p131 = scmp.eq.s32.totalorder %s16, 7
      %p132 = scmp.ne.s32.totalorder %s127, %s129
      %p133 = scmp.eq.s32.totalorder %s16, 0
      %p134 = por %p132, %p133
      %p135 = scmp.ne.s32.totalorder %s127, %s129
      %p136 = scmp.eq.s32.totalorder %s21, 7
      %p137 = por %p135, %p136
      %p138 = scmp.ne.s32.totalorder %s129, %s130
      %p139 = scmp.eq.s32.totalorder %s21, 0
      %p140 = por %p138, %p139
      %p141 = scmp.ne.s32.totalorder %s129, %s130
      %p142 = scmp.eq.s32.totalorder %s22, 7
      %p143 = por %p141, %p142
      %p145 = scmp.ne.s32.totalorder %s130, %s144
      %p146 = scmp.eq.s32.totalorder %s22, 0
      %p147 = por %p145, %p146
      %s149 = sadd.s32 %s148, 1
      %p152 = scmp.eq.s32.totalorder %s16, 7
      %p153 = scmp.ne.s32.totalorder %s148, %s150
      %p154 = scmp.eq.s32.totalorder %s16, 0
      %p155 = por %p153, %p154
      %p156 = scmp.ne.s32.totalorder %s148, %s150
      %p157 = scmp.eq.s32.totalorder %s21, 7
      %p158 = por %p156, %p157
      %p159 = scmp.ne.s32.totalorder %s150, %s151
      %p160 = scmp.eq.s32.totalorder %s21, 0
      %p161 = por %p159, %p160
      %p162 = scmp.ne.s32.totalorder %s150, %s151
      %p163 = scmp.eq.s32.totalorder %s22, 7
      %p164 = por %p162, %p163
      %p166 = scmp.ne.s32.totalorder %s151, %s165
      %p167 = scmp.eq.s32.totalorder %s22, 0
      %p168 = por %p166, %p167
      %s170 = sadd.s32 %s169, 1
      %p173 = scmp.eq.s32.totalorder %s16, 7
      %p174 = scmp.ne.s32.totalorder %s169, %s171
      %p175 = scmp.eq.s32.totalorder %s16, 0
      %p176 = por %p174, %p175
      %p177 = scmp.ne.s32.totalorder %s169, %s171
      %p178 = scmp.eq.s32.totalorder %s21, 7
      %p179 = por %p177, %p178
      %p180 = scmp.ne.s32.totalorder %s171, %s172
      %p181 = scmp.eq.s32.totalorder %s21, 0
      %p182 = por %p180, %p181
      %p183 = scmp.ne.s32.totalorder %s171, %s172
      %p184 = scmp.eq.s32.totalorder %s22, 7
      %p185 = por %p183, %p184
      %p187 = scmp.ne.s32.totalorder %s172, %s186
      %p188 = scmp.eq.s32.totalorder %s22, 0
      %p189 = por %p187, %p188
      %s190 = ssub.s32 %s23, %s35
      %s191 = ssub.s32 %s24, %s31
      %s192 = sor.u32 %s190, %s191
      %p193 = scmp.eq.s32.totalorder %s192, 0
      %s195 = sadd.s32 %s194, 1
      %s196 = scalar_select %p193, %s194, %s195
      %p199 = pneg %p193
      %p200 = scmp.eq.s32.totalorder %s16, 7
      %p201 = por %p199, %p200
      %p202 = scmp.ne.s32.totalorder %s194, %s197
      %p203 = scmp.eq.s32.totalorder %s16, 0
      %p204 = por %p202, %p203
      %p205 = scmp.ne.s32.totalorder %s194, %s197
      %p206 = scmp.eq.s32.totalorder %s21, 7
      %p207 = por %p205, %p206
      %p208 = scmp.ne.s32.totalorder %s197, %s198
      %p209 = scmp.eq.s32.totalorder %s21, 0
      %p210 = por %p208, %p209
      %p211 = scmp.ne.s32.totalorder %s197, %s198
      %p212 = scmp.eq.s32.totalorder %s22, 7
      %p213 = por %p211, %p212
      %p215 = scmp.ne.s32.totalorder %s198, %s214
      %p216 = scmp.eq.s32.totalorder %s22, 0
      %p217 = por %p215, %p216
      %p218 = scmp.le.s32.totalorder 1, %s16
      %p219 = scmp.lt.s32.totalorder %s16, 9
      %p220 = pnand %p218, %p219
      %p221 = pneg %p220
      // Predicated region
      $region9: #{tpu_custom_call.1} parent=5 // pred_check
        _
      $region10: #{tpu_custom_call.1} parent=5 // pred_check_branch
        %223 = sbr.rel (%p220) target = $region12
      $region11: #{tpu_custom_call.1} parent=5 // pred_region
        %s224 = ssub.s32 %s16, 1
        // Predicated region
        $region13: #{tpu_custom_call.1} parent=11 // pred_check
          %p225 = pneg %p77
        $region14: #{tpu_custom_call.1} parent=11 // pred_check_branch
          %227 = sbr.rel (%p225) target = $region16
        $region15: #{tpu_custom_call.1} parent=11 // pred_region
          _
        $region16: #{tpu_custom_call.1} parent=11 // pred_fallthru
          _
        // Predicated region
        $region17: #{tpu_custom_call.1} parent=11 // pred_check
          %p228 = pneg %p98
        $region18: #{tpu_custom_call.1} parent=11 // pred_check_branch
          %230 = sbr.rel (%p228) target = $region20
        $region19: #{tpu_custom_call.1} parent=11 // pred_region
          _
        $region20: #{tpu_custom_call.1} parent=11 // pred_fallthru
          _
        // Predicated region
        $region21: #{tpu_custom_call.1} parent=11 // pred_check
          %p231 = pneg %p119
        $region22: #{tpu_custom_call.1} parent=11 // pred_check_branch
          %233 = sbr.rel (%p231) target = $region24
        $region23: #{tpu_custom_call.1} parent=11 // pred_region
          _
        $region24: #{tpu_custom_call.1} parent=11 // pred_fallthru
          _
        // Predicated region
        $region25: #{tpu_custom_call.1} parent=11 // pred_check
          %p234 = pneg %p140
        $region26: #{tpu_custom_call.1} parent=11 // pred_check_branch
          %236 = sbr.rel (%p234) target = $region28
        $region27: #{tpu_custom_call.1} parent=11 // pred_region
          _
        $region28: #{tpu_custom_call.1} parent=11 // pred_fallthru
          _
        // Predicated region
        $region29: #{tpu_custom_call.1} parent=11 // pred_check
          %p237 = pneg %p161
        $region30: #{tpu_custom_call.1} parent=11 // pred_check_branch
          %239 = sbr.rel (%p237) target = $region32
        $region31: #{tpu_custom_call.1} parent=11 // pred_region
          _
        $region32: #{tpu_custom_call.1} parent=11 // pred_fallthru
          _
        // Predicated region
        $region33: #{tpu_custom_call.1} parent=11 // pred_check
          %p240 = pneg %p182
        $region34: #{tpu_custom_call.1} parent=11 // pred_check_branch
          %242 = sbr.rel (%p240) target = $region36
        $region35: #{tpu_custom_call.1} parent=11 // pred_region
          _
        $region36: #{tpu_custom_call.1} parent=11 // pred_fallthru
          _
      $region12: #{tpu_custom_call.1} parent=5 // pred_fallthru
        _
      %p243 = scmp.lt.s32.totalorder %s16, 8
      // Predicated region
      $region37: #{tpu_custom_call.1} parent=5 // pred_check
        %p244 = pneg %p243
      $region38: #{tpu_custom_call.1} parent=5 // pred_check_branch
        %246 = sbr.rel (%p244) target = $region40
      $region39: #{tpu_custom_call.1} parent=5 // pred_region
        // Predicated region
        $region41: #{tpu_custom_call.1} parent=39 // pred_check
          %p247 = pneg %p50
        $region42: #{tpu_custom_call.1} parent=39 // pred_check_branch
          %249 = sbr.rel (%p247) target = $region44
        $region43: #{tpu_custom_call.1} parent=39 // pred_region
          %p250 = scmp.lt.s32.totalorder %s23, 1
          %s251 = scalar_select %p250, %s23, 1
          %p252 = scmp.lt.s32.totalorder %s24, 3
          %s253 = scalar_select %p252, %s24, 3
          %s254 = smul.addr %s251, 4
          %s255 = sadd.s32 %s253, %s254
          %s256 = smul.addr %s255, 4
          %s257 = scalar_lea.vmem %s0, %s256
        $region44: #{tpu_custom_call.1} parent=39 // pred_fallthru
          _
      $region40: #{tpu_custom_call.1} parent=5 // pred_fallthru
        _
      %p258 = scmp.le.s32.totalorder 1, %s16
      %p259 = scmp.lt.s32.totalorder %s16, 9
      %p260 = pnand %p258, %p259
      %p261 = pneg %p260
      // Predicated region
      $region45: #{tpu_custom_call.1} parent=5 // pred_check
        _
      $region46: #{tpu_custom_call.1} parent=5 // pred_check_branch
        %263 = sbr.rel (%p260) target = $region48
      $region47: #{tpu_custom_call.1} parent=5 // pred_region
        %s264 = ssub.s32 %s16, 1
        %p265 = scmp.lt.s32.totalorder %s25, 1
        %s266 = scalar_select %p265, %s25, 1
        %p267 = scmp.lt.s32.totalorder %s26, 3
        %s268 = scalar_select %p267, %s26, 3
        %s269 = smul.addr %s266, 4
        %s270 = sadd.s32 %s268, %s269
        %s271 = smul.addr %s270, 4
        %s272 = scalar_lea.vmem %s0, %s271
        %p273 = pneg %p56
        %p274 = pneg %p53
        %p275 = pneg %p77
        %p276 = pneg %p74
        %p277 = pneg %p98
        %p278 = pneg %p95
        %p279 = pneg %p119
        %p280 = pneg %p116
        %p281 = pneg %p140
        %p282 = pneg %p137
        %p283 = pneg %p161
        %p284 = pneg %p158
        %p285 = pneg %p182
        %p286 = pneg %p179
        %p287 = pneg %p210
        %p288 = pneg %p207
        %s289 = sand.u32 %s197, 1
        %s290 = scalar_lea.sflag [#allocation5], %s289
        %s291 = sand.u32 %s197, 1
        %s292 = smul.addr %s291, 8
        %s293 = scalar_lea.vmem [#allocation4], %s292
        %p294 = scmp.lt.s32.totalorder %s25, 1
        %s295 = scalar_select %p294, %s25, 1
        %p296 = scmp.lt.s32.totalorder %s26, 3
        %s297 = scalar_select %p296, %s26, 3
        %s298 = smul.addr %s295, 4
        %s299 = sadd.s32 %s297, %s298
        %s300 = smul.addr %s299, 4
        %s301 = scalar_lea.vmem %s0, %s300
        %p302 = scmp.eq.s32.totalorder %s26, 0
        // Predicated region
        $region49: #{tpu_custom_call.1} parent=47 // pred_check
          %p303 = pneg %p302
        $region50: #{tpu_custom_call.1} parent=47 // pred_check_branch
          %305 = sbr.rel (%p303) target = $region52
        $region51: #{tpu_custom_call.1} parent=47 // pred_region
          %306 = vst [vmem:[#allocation2] sm:$0xf] 0.0
          %307 = vst [vmem:[#allocation3] sm:$0xff] 0.0
        $region52: #{tpu_custom_call.1} parent=47 // pred_fallthru
          _
        %v308 = vld [vmem:[#allocation2] sm:$0xf]
        %v309 = vld [vmem:[#allocation3] sm:$0xff]
        %v310 = vld [vmem:[%s301] sm:$0xf]
        %v311 = vlaneseq
        %v312 = vand.u32 %v311, 127
        %vm313 = vcmp.ge.s32.totalorder %v312, 2
        %vm314 = vcmp.ge.s32.totalorder %v312, 4
        %315 = vrot.lane.b32.xlu0 %v310, 4
        %v316 = vpop.permute.xlu0 %315
        %317 = vrot.lane.b32.xlu0 %v308, 4
        %v318 = vpop.permute.xlu0 %317
        %v319 = vsel %vm314, 1, 0
        %vm320 = vcmp.eq.s32.totalorder %v319, 1
        %v321 = vsel %vm320, %v316, %v318
        %322 = vrot.lane.b32.xlu0 %v310, 2
        %v323 = vpop.permute.xlu0 %322
        %324 = vrot.lane.b32.xlu0 %v308, 2
        %v325 = vpop.permute.xlu0 %324
        %v326 = vsel %vm313, 1, 0
        %vm327 = vcmp.eq.s32.totalorder %v326, 1
        %v328 = vsel %vm327, %v323, %v325
        %v330 = vrot.slane %v328, 4
        %vm332 = vcmask 1043456
        %v333 = vsel %vm332, %v321, %v330
        %v334 = vld [vmem:[%s1] sm:$0xff]
        %v335 = vld [vmem:[%s2] sm:$0xff]
        %337 = vset.pattern.permute.xlu0 0
        %338 = vperm.xlu0 %337, %v335
        %v339 = vpop.permute.xlu0 %338
        %vm341 = vcmask 97280
        %v343 = vsel %vm341, %v334, 0
        %v346 = vsel %vm332, %v310, 0
        %348 = vmatprep.subr.mxu0 0.0
        %349 = vmatpush1.msra.mxu0 %v333
        %350 = vmatprep.subr.mxu0 0.0
        %351 = vmatpush1.msra.mxu0 %v346
        %352 = vmatprep.subr.mxu0 0.0
        %353 = vmatpush1.msra.mxu0 0.0
        %354 = vmatprep.subr.mxu0 0.0
        %355 = vmatpush1.msra.mxu0 0.0
        %356 = vmatprep.subr.mxu0 0.0
        %357 = vmatpush1.msra.mxu0 0.0
        %358 = vmatprep.subr.mxu0 0.0
        %359 = vmatpush1.msra.mxu0 0.0
        %360 = vmatprep.subr.mxu0 0.0
        %361 = vmatpush1.msra.mxu0 0.0
        %362 = vmatprep.subr.mxu0 0.0
        %363 = vmatpush1.msra.mxu0 0.0
        %364 = vmatprep.subr.mxu0 0.0
        %365 = vmatpush1.msra.mxu0 0.0
        %366 = vmatprep.subr.mxu0 0.0
        %367 = vmatpush1.msra.mxu0 0.0
        %368 = vmatprep.subr.mxu0 0.0
        %369 = vmatpush1.msra.mxu0 0.0
        %370 = vmatprep.subr.mxu0 0.0
        %371 = vmatpush1.msra.mxu0 0.0
        %372 = vmatprep.subr.mxu0 0.0
        %373 = vmatpush1.msra.mxu0 0.0
        %374 = vmatprep.subr.mxu0 0.0
        %375 = vmatpush1.msra.mxu0 0.0
        %376 = vmatprep.subr.mxu0 0.0
        %377 = vmatpush1.msra.mxu0 0.0
        %378 = vmatprep.subr.mxu0 0.0
        %379 = vmatpush1.msra.mxu0 0.0
        %380 = vmatprep.subr.mxu0 0.0
        %381 = vmatpush1.msra.mxu0 0.0
        %382 = vmatprep.subr.mxu0 0.0
        %383 = vmatpush1.msra.mxu0 0.0
        %384 = vmatprep.subr.mxu0 0.0
        %385 = vmatpush1.msra.mxu0 0.0
        %386 = vmatprep.subr.mxu0 0.0
        %387 = vmatpush1.msra.mxu0 0.0
        %388 = vmatprep.subr.mxu0 0.0
        %389 = vmatpush1.msra.mxu0 0.0
        %390 = vmatprep.subr.mxu0 0.0
        %391 = vmatpush1.msra.mxu0 0.0
        %392 = vmatprep.subr.mxu0 0.0
        %393 = vmatpush1.msra.mxu0 0.0
        %394 = vmatprep.subr.mxu0 0.0
        %395 = vmatpush1.msra.mxu0 0.0
        %396 = vmatprep.subr.mxu0 0.0
        %397 = vmatpush1.msra.mxu0 0.0
        %398 = vmatprep.subr.mxu0 0.0
        %399 = vmatpush1.msra.mxu0 0.0
        %400 = vmatprep.subr.mxu0 0.0
        %401 = vmatpush1.msra.mxu0 0.0
        %402 = vmatprep.subr.mxu0 0.0
        %403 = vmatpush1.msra.mxu0 0.0
        %404 = vmatprep.subr.mxu0 0.0
        %405 = vmatpush1.msra.mxu0 0.0
        %406 = vmatprep.subr.mxu0 0.0
        %407 = vmatpush1.msra.mxu0 0.0
        %408 = vmatprep.subr.mxu0 0.0
        %409 = vmatpush1.msra.mxu0 0.0
        %410 = vmatprep.subr.mxu0 0.0
        %411 = vmatpush1.msra.mxu0 0.0
        %412 = vmatprep.mubr.f32.mxu0 0.0
        %413 = vmatmul.mubr.f32.gmra.mrb[0].mxu0 %v343
        %v414 = vpop.f32.mrb[0].mxu0
        %v415 = vadd.f32 %v339, %v414
        %v416 = vpop.f32.mrb[0].mxu0
        %417 = vdwg.mxu0
        %v418 = vmax.f32 %v415, 0.0
        %419 = vrot.lane.b32.xlu0 %v418, 4
        %v420 = vpop.permute.xlu0 %419
        %421 = vrot.lane.b32.xlu0 %v309, 4
        %v422 = vpop.permute.xlu0 %421
        %v423 = vsel %vm320, %v420, %v422
        %424 = vrot.lane.b32.xlu0 %v418, 2
        %v425 = vpop.permute.xlu0 %424
        %426 = vrot.lane.b32.xlu0 %v309, 2
        %v427 = vpop.permute.xlu0 %426
        %v428 = vsel %vm327, %v425, %v427
        %v429 = vld [vmem:[%s3] sm:$0xff]
        %v430 = vld [vmem:[%s4] sm:$0xff]
        %432 = vset.pattern.permute.xlu0 0
        %433 = vperm.xlu0 %432, %v430
        %v434 = vpop.permute.xlu0 %433
        %vm436 = vcmask 195584
        %v438 = vsel %vm436, %v429, 0
        %440 = vmatprep.subr.mxu0 0.0
        %441 = vmatpush1.msra.mxu0 %v423
        %442 = vmatprep.subr.mxu0 0.0
        %443 = vmatpush1.msra.mxu0 %v428
        %444 = vmatprep.subr.mxu0 0.0
        %445 = vmatpush1.msra.mxu0 %v418
        %446 = vmatprep.subr.mxu0 0.0
        %447 = vmatpush1.msra.mxu0 0.0
        %448 = vmatprep.subr.mxu0 0.0
        %449 = vmatpush1.msra.mxu0 0.0
        %450 = vmatprep.subr.mxu0 0.0
        %451 = vmatpush1.msra.mxu0 0.0
        %452 = vmatprep.subr.mxu0 0.0
        %453 = vmatpush1.msra.mxu0 0.0
        %454 = vmatprep.subr.mxu0 0.0
        %455 = vmatpush1.msra.mxu0 0.0
        %456 = vmatprep.subr.mxu0 0.0
        %457 = vmatpush1.msra.mxu0 0.0
        %458 = vmatprep.subr.mxu0 0.0
        %459 = vmatpush1.msra.mxu0 0.0
        %460 = vmatprep.subr.mxu0 0.0
        %461 = vmatpush1.msra.mxu0 0.0
        %462 = vmatprep.subr.mxu0 0.0
        %463 = vmatpush1.msra.mxu0 0.0
        %464 = vmatprep.subr.mxu0 0.0
        %465 = vmatpush1.msra.mxu0 0.0
        %466 = vmatprep.subr.mxu0 0.0
        %467 = vmatpush1.msra.mxu0 0.0
        %468 = vmatprep.subr.mxu0 0.0
        %469 = vmatpush1.msra.mxu0 0.0
        %470 = vmatprep.subr.mxu0 0.0
        %471 = vmatpush1.msra.mxu0 0.0
        %472 = vmatprep.subr.mxu0 0.0
        %473 = vmatpush1.msra.mxu0 0.0
        %474 = vmatprep.subr.mxu0 0.0
        %475 = vmatpush1.msra.mxu0 0.0
        %476 = vmatprep.subr.mxu0 0.0
        %477 = vmatpush1.msra.mxu0 0.0
        %478 = vmatprep.subr.mxu0 0.0
        %479 = vmatpush1.msra.mxu0 0.0
        %480 = vmatprep.subr.mxu0 0.0
        %481 = vmatpush1.msra.mxu0 0.0
        %482 = vmatprep.subr.mxu0 0.0
        %483 = vmatpush1.msra.mxu0 0.0
        %484 = vmatprep.subr.mxu0 0.0
        %485 = vmatpush1.msra.mxu0 0.0
        %486 = vmatprep.subr.mxu0 0.0
        %487 = vmatpush1.msra.mxu0 0.0
        %488 = vmatprep.subr.mxu0 0.0
        %489 = vmatpush1.msra.mxu0 0.0
        %490 = vmatprep.subr.mxu0 0.0
        %491 = vmatpush1.msra.mxu0 0.0
        %492 = vmatprep.subr.mxu0 0.0
        %493 = vmatpush1.msra.mxu0 0.0
        %494 = vmatprep.subr.mxu0 0.0
        %495 = vmatpush1.msra.mxu0 0.0
        %496 = vmatprep.subr.mxu0 0.0
        %497 = vmatpush1.msra.mxu0 0.0
        %498 = vmatprep.subr.mxu0 0.0
        %499 = vmatpush1.msra.mxu0 0.0
        %500 = vmatprep.subr.mxu0 0.0
        %501 = vmatpush1.msra.mxu0 0.0
        %502 = vmatprep.subr.mxu0 0.0
        %503 = vmatpush1.msra.mxu0 0.0
        %504 = vmatprep.mubr.f32.mxu0 0.0
        %505 = vmatmul.mubr.f32.gmra.mrb[0].mxu0 %v438
        %v506 = vpop.f32.mrb[0].mxu0
        %v507 = vadd.f32 %v434, %v506
        %v508 = vpop.f32.mrb[0].mxu0
        %509 = vdwg.mxu0
        %v510 = vmax.f32 %v507, 0.0
        %511 = vst [vmem:[#allocation2] sm:$0xf] %v310
        %512 = vst [vmem:[#allocation3] sm:$0xff] %v418
        %v513 = vld [vmem:[%s5] sm:$0xff]
        %v514 = vld [vmem:[%s6] sm:$0xff]
        %516 = vset.pattern.permute.xlu0 0
        %517 = vperm.xlu0 %516, %v514
        %v518 = vpop.permute.xlu0 %517
        %vm520 = vcmask 31744
        %v522 = vsel %vm520, %v513, 0
        %524 = vmatprep.subr.mxu0 0.0
        %525 = vmatpush1.msra.mxu0 %v346
        %526 = vmatprep.subr.mxu0 0.0
        %527 = vmatpush1.msra.mxu0 0.0
        %528 = vmatprep.subr.mxu0 0.0
        %529 = vmatpush1.msra.mxu0 0.0
        %530 = vmatprep.subr.mxu0 0.0
        %531 = vmatpush1.msra.mxu0 0.0
        %532 = vmatprep.subr.mxu0 0.0
        %533 = vmatpush1.msra.mxu0 0.0
        %534 = vmatprep.subr.mxu0 0.0
        %535 = vmatpush1.msra.mxu0 0.0
        %536 = vmatprep.subr.mxu0 0.0
        %537 = vmatpush1.msra.mxu0 0.0
        %538 = vmatprep.subr.mxu0 0.0
        %539 = vmatpush1.msra.mxu0 0.0
        %540 = vmatprep.subr.mxu0 0.0
        %541 = vmatpush1.msra.mxu0 0.0
        %542 = vmatprep.subr.mxu0 0.0
        %543 = vmatpush1.msra.mxu0 0.0
        %544 = vmatprep.subr.mxu0 0.0
        %545 = vmatpush1.msra.mxu0 0.0
        %546 = vmatprep.subr.mxu0 0.0
        %547 = vmatpush1.msra.mxu0 0.0
        %548 = vmatprep.subr.mxu0 0.0
        %549 = vmatpush1.msra.mxu0 0.0
        %550 = vmatprep.subr.mxu0 0.0
        %551 = vmatpush1.msra.mxu0 0.0
        %552 = vmatprep.subr.mxu0 0.0
        %553 = vmatpush1.msra.mxu0 0.0
        %554 = vmatprep.subr.mxu0 0.0
        %555 = vmatpush1.msra.mxu0 0.0
        %556 = vmatprep.subr.mxu0 0.0
        %557 = vmatpush1.msra.mxu0 0.0
        %558 = vmatprep.subr.mxu0 0.0
        %559 = vmatpush1.msra.mxu0 0.0
        %560 = vmatprep.subr.mxu0 0.0
        %561 = vmatpush1.msra.mxu0 0.0
        %562 = vmatprep.subr.mxu0 0.0
        %563 = vmatpush1.msra.mxu0 0.0
        %564 = vmatprep.subr.mxu0 0.0
        %565 = vmatpush1.msra.mxu0 0.0
        %566 = vmatprep.subr.mxu0 0.0
        %567 = vmatpush1.msra.mxu0 0.0
        %568 = vmatprep.subr.mxu0 0.0
        %569 = vmatpush1.msra.mxu0 0.0
        %570 = vmatprep.subr.mxu0 0.0
        %571 = vmatpush1.msra.mxu0 0.0
        %572 = vmatprep.subr.mxu0 0.0
        %573 = vmatpush1.msra.mxu0 0.0
        %574 = vmatprep.subr.mxu0 0.0
        %575 = vmatpush1.msra.mxu0 0.0
        %576 = vmatprep.subr.mxu0 0.0
        %577 = vmatpush1.msra.mxu0 0.0
        %578 = vmatprep.subr.mxu0 0.0
        %579 = vmatpush1.msra.mxu0 0.0
        %580 = vmatprep.subr.mxu0 0.0
        %581 = vmatpush1.msra.mxu0 0.0
        %582 = vmatprep.subr.mxu0 0.0
        %583 = vmatpush1.msra.mxu0 0.0
        %584 = vmatprep.subr.mxu0 0.0
        %585 = vmatpush1.msra.mxu0 0.0
        %586 = vmatprep.subr.mxu0 0.0
        %587 = vmatpush1.msra.mxu0 0.0
        %588 = vmatprep.mubr.f32.mxu0 0.0
        %589 = vmatmul.mubr.f32.gmra.mrb[0].mxu0 %v522
        %v590 = vpop.f32.mrb[0].mxu0
        %v591 = vadd.f32 %v518, %v590
        %v592 = vpop.f32.mrb[0].mxu0
        %593 = vdwg.mxu0
        %v594 = vadd.f32 %v510, %v591
        %v595 = vmax.f32 %v594, 0.0
        %596 = vst [vmem:[%s293] sm:$0xff] %v595
        %s597 = sand.u32 %s197, 1
        %s598 = scalar_lea.sflag [#allocation5], %s597
        %s599 = sand.u32 %s197, 1
        %s600 = smul.addr %s599, 8
        %s601 = scalar_lea.vmem [#allocation4], %s600
        // Predicated region
        $region53: #{tpu_custom_call.1} parent=47 // pred_check
          %p602 = pneg %p207
        $region54: #{tpu_custom_call.1} parent=47 // pred_check_branch
          %604 = sbr.rel (%p602) target = $region56
        $region55: #{tpu_custom_call.1} parent=47 // pred_region
          %s606 = ssub.s32 128, 128
          %607 = vsyncadd %s598, %s606
          %s608 = smul.addr %s25, 4
          %s609 = sadd.s32 %s26, %s608
          %s610 = smul.addr %s609, 128
          %s611 = scalar_lea.hbm %s7, %s610
          %s613 = sshll.u32 %s601, 4
          %s614 = int_to_ptr.vmem [resolvable:$true] %s613
          %616 = dma.vmem_to_hbm [thread:$0]  %s614, 128, %s611, %s598
        $region56: #{tpu_custom_call.1} parent=47 // pred_fallthru
          _
      $region48: #{tpu_custom_call.1} parent=5 // pred_fallthru
        _
      %p617 = scmp.le.s32.totalorder 2, %s16
      // Predicated region
      $region57: #{tpu_custom_call.1} parent=5 // pred_check
        %p618 = pneg %p617
      $region58: #{tpu_custom_call.1} parent=5 // pred_check_branch
        %620 = sbr.rel (%p618) target = $region60
      $region59: #{tpu_custom_call.1} parent=5 // pred_region
        %s621 = ssub.s32 %s16, 2
        // Predicated region
        $region61: #{tpu_custom_call.1} parent=59 // pred_check
          %p622 = pneg %p213
        $region62: #{tpu_custom_call.1} parent=59 // pred_check_branch
          %624 = sbr.rel (%p622) target = $region64
        $region63: #{tpu_custom_call.1} parent=59 // pred_region
          %s625 = sand.u32 %s198, 1
          %s626 = scalar_lea.sflag [#allocation5], %s625
          %s627 = sand.u32 %s198, 1
          %s628 = smul.addr %s627, 8
          %s629 = scalar_lea.vmem [#allocation4], %s628
          %630 = dma.done %s626, 128
        $region64: #{tpu_custom_call.1} parent=59 // pred_fallthru
          _
      $region60: #{tpu_custom_call.1} parent=5 // pred_fallthru
        _
    $region6: #{tpu_custom_call.1} parent=1 // loop_footer
      %s20 = sadd.s32 1, %s16
    $region7: #{tpu_custom_call.1} parent=1 // loop_footer_branch
      %15 = sbr.rel target = $region3
    $region8: #{tpu_custom_call.1} parent=1 // loop_exit
      _
    %631 = vsyncpa [#allocation5], 1
    %s632 = scalar_lea.sflag [#allocation5], 1
    %633 = vsyncpa %s632, 1

</llo_original>
